<compile_context>
chip_gen: v7x
topology: tpu7x:2x2x1
jax: 0.10.0
libtpu: 0.0.40
codegen_flags: <defaults>
</compile_context>

<pallas_src>
import jax
import jax.numpy as jnp
from jax.experimental import pallas as pl
from jax.experimental.pallas import tpu as pltpu


def _mlp_kernel(x_ref, w1_ref, b1_ref, w2_ref, b2_ref, o_ref):
    # x_ref:  (TB, D_in)   w1_ref: (D_in, H)   b1_ref: (1, H)
    # w2_ref: (H, D_out)   b2_ref: (1, D_out)  o_ref:  (TB, D_out)
    x = x_ref[...].astype(w1_ref.dtype)       # in-kernel cast (free under DMA bound)
    h = jnp.dot(x, w1_ref[...], preferred_element_type=jnp.float32)
    h = jnp.maximum(h + b1_ref[...], 0.0)     # f32 bias + ReLU on the VPU
    h = h.astype(w2_ref.dtype)                # feed MXU in weight dtype
    y = jnp.dot(h, w2_ref[...], preferred_element_type=jnp.float32)
    o_ref[...] = (y + b2_ref[...]).astype(o_ref.dtype)


def _round_up(n, m):
    return (n + m - 1) // m * m


_SMALL_BATCH = 256   # below this: one grid step covers the (padded) batch
_MAX_TILE = 1024     # large-batch tile cap: amortizes ~0.35 us/step; VMEM is trivial


def _choose_batch_tile(B):
    """Returns (tb, padded_B); tb is a multiple of 16 (f32 and bf16 sublane packing)."""
    if B < _SMALL_BATCH:
        tb = _round_up(max(B, 16), 16)
        return tb, tb
    # Large batch: at least 2 parallel grid steps (keeps both v7x TensorCores
    # busy), tiles capped at _MAX_TILE, batch padded up to a multiple of the tile.
    steps = max(2, pl.cdiv(B, _MAX_TILE))
    tb = _round_up(pl.cdiv(B, steps), 16)
    return tb, _round_up(B, tb)


def wrapped_model_forward(x, w1, b1, w2, b2, *, tb=None, mxu_dtype=None, out_dtype=None):
    """Pallas implementation of WrappedModel(inner_mlp).forward(x)."""
    B, D_in = x.shape
    H = w1.shape[1]
    D_out = w2.shape[1]
    if out_dtype is None:
        out_dtype = x.dtype   # pass out_dtype=jnp.bfloat16 on v6e/v7x to halve output bytes

    if tb is None:
        tb, B_pad = _choose_batch_tile(B)
    else:
        B_pad = _round_up(B, tb)

    if B_pad != B:
        x = jnp.pad(x, ((0, B_pad - B), (0, 0)))

    # Tiny parameter casts only (constant-fold under jit); x is NOT pre-cast --
    # the mxu_dtype cast happens in-kernel.  bf16 MXU path is valid on v5e too.
    w_dtype = jnp.float32 if mxu_dtype is None else mxu_dtype
    w1 = w1.astype(w_dtype)
    w2 = w2.astype(w_dtype)
    b1 = b1.astype(jnp.float32)
    b2 = b2.astype(jnp.float32)

    grid = (B_pad // tb,)
    out = pl.pallas_call(
        _mlp_kernel,
        out_shape=jax.ShapeDtypeStruct((B_pad, D_out), out_dtype),
        grid_spec=pl.GridSpec(
            grid=grid,
            in_specs=[
                pl.BlockSpec((tb, D_in), lambda i: (i, 0)),   # x: streamed over batch
                pl.BlockSpec((D_in, H), lambda i: (0, 0)),    # W1: resident across steps
                pl.BlockSpec((1, H), lambda i: (0, 0)),       # b1: resident
                pl.BlockSpec((H, D_out), lambda i: (0, 0)),   # W2: resident
                pl.BlockSpec((1, D_out), lambda i: (0, 0)),   # b2: resident
            ],
            out_specs=pl.BlockSpec((tb, D_out), lambda i: (i, 0)),  # unpadded 32-wide store
        ),
        compiler_params=pltpu.CompilerParams(
            dimension_semantics=("parallel",),
        ),
    )(x, w1, b1, w2, b2)

    if B_pad != B:
        out = out[:B]
    return out


def _reference_forward(x, w1, b1, w2, b2):
    h = jnp.maximum(x @ w1 + b1, 0.0)
    return h @ w2 + b2


if __name__ == "__main__":
    # Small shapes consistent with a Linear-based inner module.
    B, D_IN, H, D_OUT = 16, 32, 128, 32

    key = jax.random.PRNGKey(0)
    kx, kw1, kb1, kw2, kb2 = jax.random.split(key, 5)

    # Deterministic synthetic parameters (no checkpoint load).
    x = jax.random.normal(kx, (B, D_IN), dtype=jnp.float32)
    w1 = jax.random.normal(kw1, (D_IN, H), dtype=jnp.float32) * 0.05
    b1 = jax.random.normal(kb1, (1, H), dtype=jnp.float32) * 0.01
    w2 = jax.random.normal(kw2, (H, D_OUT), dtype=jnp.float32) * 0.05
    b2 = jax.random.normal(kb2, (1, D_OUT), dtype=jnp.float32) * 0.01

    # f32 end-to-end for the correctness check; pass mxu_dtype=jnp.bfloat16 (and
    # optionally out_dtype=jnp.bfloat16) for the higher-throughput MXU/HBM path.
    out = wrapped_model_forward(x, w1, b1, w2, b2)
    out = jax.block_until_ready(out)

    ref = _reference_forward(x, w1, b1, w2, b2)
    assert out.shape == (B, D_OUT)
    assert jnp.allclose(out, ref, rtol=1e-3, atol=1e-3), "mismatch vs JAX reference"

    # Exercise the padded-batch path (B not a multiple of the 16-row sublane tile).
    B2 = 40
    x2 = jax.random.normal(kx, (B2, D_IN), dtype=jnp.float32)
    out2 = jax.block_until_ready(wrapped_model_forward(x2, w1, b1, w2, b2))
    ref2 = _reference_forward(x2, w1, b1, w2, b2)
    assert out2.shape == (B2, D_OUT)
    assert jnp.allclose(out2, ref2, rtol=1e-3, atol=1e-3), "mismatch (padded batch)"

    print("KERNEL_OK")
</pallas_src>

<mosaic_0001>
module attributes {stable_mosaic.version = 11 : i64} {
  func.func @_mlp_kernel(%arg0: i32, %arg1: memref<16x32xf32, #tpu.memory_space<vmem>>, %arg2: memref<32x128xf32, #tpu.memory_space<vmem>>, %arg3: memref<1x128xf32, #tpu.memory_space<vmem>>, %arg4: memref<128x32xf32, #tpu.memory_space<vmem>>, %arg5: memref<1x32xf32, #tpu.memory_space<vmem>>, %arg6: memref<16x32xf32, #tpu.memory_space<vmem>>) attributes {dimension_semantics = [#tpu.dimension_semantics<parallel>], iteration_bounds = array<i64: 1>, scalar_prefetch = 0 : i64, scratch_operands = 0 : i64, tpu.core_type = #tpu.core_type<tc>, window_params = [{transform_indices = @transform_0, window_bounds = array<i64: 16, 32>}, {pipeline_mode = #tpu.pipeline_mode<synchronous>, transform_indices = @transform_1, window_bounds = array<i64: 32, 128>}, {pipeline_mode = #tpu.pipeline_mode<synchronous>, transform_indices = @transform_2, window_bounds = array<i64: 1, 128>}, {pipeline_mode = #tpu.pipeline_mode<synchronous>, transform_indices = @transform_3, window_bounds = array<i64: 128, 32>}, {pipeline_mode = #tpu.pipeline_mode<synchronous>, transform_indices = @transform_4, window_bounds = array<i64: 1, 32>}, {transform_indices = @transform_5, window_bounds = array<i64: 16, 32>}]} {
    %c0 = arith.constant 0 : index
    %c0_0 = arith.constant 0 : index
    %0 = vector.load %arg1[%c0, %c0_0] : memref<16x32xf32, #tpu.memory_space<vmem>>, vector<16x32xf32>
    %c0_1 = arith.constant 0 : index
    %c0_2 = arith.constant 0 : index
    %1 = vector.load %arg2[%c0_1, %c0_2] : memref<32x128xf32, #tpu.memory_space<vmem>>, vector<32x128xf32>
    %cst = arith.constant dense<0.000000e+00> : vector<16x128xf32>
    %2 = tpu.matmul %0, %1, %cst {dimension_numbers = #tpu.dot_dimension_numbers<[1], [0], [0], [1], [0, 0, 1, 1], [], []>} : vector<16x32xf32>, vector<32x128xf32>, vector<16x128xf32> -> vector<16x128xf32>
    %c0_3 = arith.constant 0 : index
    %c0_4 = arith.constant 0 : index
    %3 = vector.load %arg3[%c0_3, %c0_4] : memref<1x128xf32, #tpu.memory_space<vmem>>, vector<1x128xf32>
    %4 = vector.broadcast %3 : vector<1x128xf32> to vector<16x128xf32>
    %5 = arith.addf %2, %4 : vector<16x128xf32>
    %cst_5 = arith.constant 0.000000e+00 : f32
    %6 = vector.broadcast %cst_5 : f32 to vector<16x128xf32>
    %7 = arith.maximumf %5, %6 : vector<16x128xf32>
    %c0_6 = arith.constant 0 : index
    %c0_7 = arith.constant 0 : index
    %8 = vector.load %arg4[%c0_6, %c0_7] : memref<128x32xf32, #tpu.memory_space<vmem>>, vector<128x32xf32>
    %cst_8 = arith.constant dense<0.000000e+00> : vector<16x32xf32>
    %9 = tpu.matmul %7, %8, %cst_8 {dimension_numbers = #tpu.dot_dimension_numbers<[1], [0], [0], [1], [0, 0, 1, 1], [], []>} : vector<16x128xf32>, vector<128x32xf32>, vector<16x32xf32> -> vector<16x32xf32>
    %c0_9 = arith.constant 0 : index
    %c0_10 = arith.constant 0 : index
    %10 = vector.load %arg5[%c0_9, %c0_10] : memref<1x32xf32, #tpu.memory_space<vmem>>, vector<1x32xf32>
    %11 = vector.broadcast %10 : vector<1x32xf32> to vector<16x32xf32>
    %12 = arith.addf %9, %11 : vector<16x32xf32>
    %c0_11 = arith.constant 0 : index
    %c0_12 = arith.constant 0 : index
    %13 = vector.load %arg6[%c0_11, %c0_12] : memref<16x32xf32, #tpu.memory_space<vmem>>, vector<16x32xf32>
    tpu.vector_store %arg6[%c0_11, %c0_12], %12 {strides = array<i32>} : memref<16x32xf32, #tpu.memory_space<vmem>>, vector<16x32xf32>,
    return
  }
  func.func @transform_0(%arg0: i32) -> (i32, i32) {
    %c0_i32 = arith.constant 0 : i32
    %c0_i32_0 = arith.constant 0 : i32
    return %arg0, %c0_i32 : i32, i32
  }
  func.func @transform_1(%arg0: i32) -> (i32, i32) {
    %c0_i32 = arith.constant 0 : i32
    %c0_i32_0 = arith.constant 0 : i32
    %c0_i32_1 = arith.constant 0 : i32
    return %c0_i32, %c0_i32_0 : i32, i32
  }
  func.func @transform_2(%arg0: i32) -> (i32, i32) {
    %c0_i32 = arith.constant 0 : i32
    %c0_i32_0 = arith.constant 0 : i32
    %c0_i32_1 = arith.constant 0 : i32
    return %c0_i32, %c0_i32_0 : i32, i32
  }
  func.func @transform_3(%arg0: i32) -> (i32, i32) {
    %c0_i32 = arith.constant 0 : i32
    %c0_i32_0 = arith.constant 0 : i32
    %c0_i32_1 = arith.constant 0 : i32
    return %c0_i32, %c0_i32_0 : i32, i32
  }
  func.func @transform_4(%arg0: i32) -> (i32, i32) {
    %c0_i32 = arith.constant 0 : i32
    %c0_i32_0 = arith.constant 0 : i32
    %c0_i32_1 = arith.constant 0 : i32
    return %c0_i32, %c0_i32_0 : i32, i32
  }
  func.func @transform_5(%arg0: i32) -> (i32, i32) {
    %c0_i32 = arith.constant 0 : i32
    %c0_i32_0 = arith.constant 0 : i32
    return %arg0, %c0_i32 : i32, i32
  }
}

</mosaic_0001>

<llo_original>
// kernel: tpu_custom_call.1
$region0: #{tpu_custom_call.1}
  #allocation0 [shape = 'u32[]', space=smem, size = 0x4, offset = 0x4, fixed_abs, tag = 'smem constant byte address 0x4 - core index']
  #allocation1 [shape = 'u32[144,128]{1,0:T(1,128)}', space=vmem, size = 0x12000, scoped, tag = 'internal scratch']
  %s0 = inlined_call_operand.vmem [shape: f32[16,32], index: 0, kind: input, shape index: {}]
  %s1 = inlined_call_operand.vmem [shape: f32[32,128], index: 1, kind: input, shape index: {}]
  %s2 = inlined_call_operand.vmem [shape: f32[1,128], index: 2, kind: input, shape index: {}]
  %s3 = inlined_call_operand.vmem [shape: f32[128,32], index: 3, kind: input, shape index: {}]
  %s4 = inlined_call_operand.vmem [shape: f32[1,32], index: 4, kind: input, shape index: {}]
  %s5 = inlined_call_operand.hbm [shape: f32[16,32], index: 5, kind: output, shape index: {}]
  %s6 = sld [smem:[#allocation0]]
  $region30: #{tpu_custom_call.1} parent=0
    _
  %s8 = ssub.s32 1, %s6
  %s9 = scalar_select 0, %s8, %s6
  $region1: #{tpu_custom_call.1} parent=0
    #allocation2 [shape = 'u8[8192]{0}', space=vmem, size = 0x2000, scoped, tag = 'output window, operand 0, single buffered']
    #allocation3 [shape = 's32[1]{0}', space=sflag, size = 0x4, scoped, tag = 'scoped memory for tpu_custom_call.1']
    %10 = vsyncpa [#allocation3], 0
    // Predicated region
    $region2: #{tpu_custom_call.1} parent=1 // pred_check
      _
    $region3: #{tpu_custom_call.1} parent=1 // pred_check_branch
      %12 = sbr.rel (0) target = $region5
    $region4: #{tpu_custom_call.1} parent=1 // pred_region
      _
    $region5: #{tpu_custom_call.1} parent=1 // pred_fallthru
      _
    // Predicated region
    $region6: #{tpu_custom_call.1} parent=1 // pred_check
      _
    $region7: #{tpu_custom_call.1} parent=1 // pred_check_branch
      %14 = sbr.rel (0) target = $region9
    $region8: #{tpu_custom_call.1} parent=1 // pred_region
      _
    $region9: #{tpu_custom_call.1} parent=1 // pred_fallthru
      _
    // Predicated region
    $region10: #{tpu_custom_call.1} parent=1 // pred_check
      _
    $region11: #{tpu_custom_call.1} parent=1 // pred_check_branch
      %16 = sbr.rel (0) target = $region13
    $region12: #{tpu_custom_call.1} parent=1 // pred_region
      _
    $region13: #{tpu_custom_call.1} parent=1 // pred_fallthru
      _
    // Predicated region
    $region14: #{tpu_custom_call.1} parent=1 // pred_check
      _
    $region15: #{tpu_custom_call.1} parent=1 // pred_check_branch
      %18 = sbr.rel (0) target = $region17
    $region16: #{tpu_custom_call.1} parent=1 // pred_region
      _
    $region17: #{tpu_custom_call.1} parent=1 // pred_fallthru
      _
    // Predicated region
    $region18: #{tpu_custom_call.1} parent=1 // pred_check
      _
    $region19: #{tpu_custom_call.1} parent=1 // pred_check_branch
      %20 = sbr.rel (0) target = $region21
    $region20: #{tpu_custom_call.1} parent=1 // pred_region
      _
    $region21: #{tpu_custom_call.1} parent=1 // pred_fallthru
      _
    %v21 = vld [vmem:[%s0] sm:$0xff]
    %v22 = vld [vmem:[%s0 + $0x8] sm:$0xff]
    %v23 = vld [vmem:[%s1] sm:$0xff]
    %v24 = vld [vmem:[%s1 + $0x8] sm:$0xff]
    %v25 = vld [vmem:[%s1 + $0x10] sm:$0xff]
    %v26 = vld [vmem:[%s1 + $0x18] sm:$0xff]
    %v27 = vld [vmem:[%s2] sm:$0x1]
    %v29 = vlaneseq
    %v30 = vshrl.u32 %v29, 7
    %v31 = vsub.s32 0, %v30
    %v32 = vrot.slane %v27, %v31
    %vm34 = vcmask 261120
    %v36 = vsel %vm34, %v21, 0
    %v39 = vsel %vm34, %v22, 0
    %41 = vmatprep.subr.mxu0 0.0
    %42 = vmatpush1.msra.mxu0 %v23
    %43 = vmatprep.subr.mxu0 0.0
    %44 = vmatpush1.msra.mxu0 %v24
    %45 = vmatprep.subr.mxu0 0.0
    %46 = vmatpush1.msra.mxu0 %v25
    %47 = vmatprep.subr.mxu0 0.0
    %48 = vmatpush1.msra.mxu0 %v26
    %49 = vmatprep.subr.mxu0 0.0
    %50 = vmatpush1.msra.mxu0 0.0
    %51 = vmatprep.subr.mxu0 0.0
    %52 = vmatpush1.msra.mxu0 0.0
    %53 = vmatprep.subr.mxu0 0.0
    %54 = vmatpush1.msra.mxu0 0.0
    %55 = vmatprep.subr.mxu0 0.0
    %56 = vmatpush1.msra.mxu0 0.0
    %57 = vmatprep.subr.mxu0 0.0
    %58 = vmatpush1.msra.mxu0 0.0
    %59 = vmatprep.subr.mxu0 0.0
    %60 = vmatpush1.msra.mxu0 0.0
    %61 = vmatprep.subr.mxu0 0.0
    %62 = vmatpush1.msra.mxu0 0.0
    %63 = vmatprep.subr.mxu0 0.0
    %64 = vmatpush1.msra.mxu0 0.0
    %65 = vmatprep.subr.mxu0 0.0
    %66 = vmatpush1.msra.mxu0 0.0
    %67 = vmatprep.subr.mxu0 0.0
    %68 = vmatpush1.msra.mxu0 0.0
    %69 = vmatprep.subr.mxu0 0.0
    %70 = vmatpush1.msra.mxu0 0.0
    %71 = vmatprep.subr.mxu0 0.0
    %72 = vmatpush1.msra.mxu0 0.0
    %73 = vmatprep.subr.mxu0 0.0
    %74 = vmatpush1.msra.mxu0 0.0
    %75 = vmatprep.subr.mxu0 0.0
    %76 = vmatpush1.msra.mxu0 0.0
    %77 = vmatprep.subr.mxu0 0.0
    %78 = vmatpush1.msra.mxu0 0.0
    %79 = vmatprep.subr.mxu0 0.0
    %80 = vmatpush1.msra.mxu0 0.0
    %81 = vmatprep.subr.mxu0 0.0
    %82 = vmatpush1.msra.mxu0 0.0
    %83 = vmatprep.subr.mxu0 0.0
    %84 = vmatpush1.msra.mxu0 0.0
    %85 = vmatprep.subr.mxu0 0.0
    %86 = vmatpush1.msra.mxu0 0.0
    %87 = vmatprep.subr.mxu0 0.0
    %88 = vmatpush1.msra.mxu0 0.0
    %89 = vmatprep.subr.mxu0 0.0
    %90 = vmatpush1.msra.mxu0 0.0
    %91 = vmatprep.subr.mxu0 0.0
    %92 = vmatpush1.msra.mxu0 0.0
    %93 = vmatprep.subr.mxu0 0.0
    %94 = vmatpush1.msra.mxu0 0.0
    %95 = vmatprep.subr.mxu0 0.0
    %96 = vmatpush1.msra.mxu0 0.0
    %97 = vmatprep.subr.mxu0 0.0
    %98 = vmatpush1.msra.mxu0 0.0
    %99 = vmatprep.subr.mxu0 0.0
    %100 = vmatpush1.msra.mxu0 0.0
    %101 = vmatprep.subr.mxu0 0.0
    %102 = vmatpush1.msra.mxu0 0.0
    %103 = vmatprep.subr.mxu0 0.0
    %104 = vmatpush1.msra.mxu0 0.0
    %105 = vmatprep.mubr.f32.mxu0 0.0
    %106 = vmatmul.mubr.f32.gmra.mrb[0].mxu0 %v36
    %v107 = vpop.f32.mrb[0].mxu0
    %v108 = vadd.f32 %v32, %v107
    %v109 = vpop.f32.mrb[0].mxu0
    %110 = vmatprep.mubr.f32.mxu0 0.0
    %111 = vmatmul.mubr.f32.gmra.mrb[0].mxu0 %v39
    %v112 = vpop.f32.mrb[0].mxu0
    %v113 = vadd.f32 %v32, %v112
    %v114 = vpop.f32.mrb[0].mxu0
    %115 = vdwg.mxu0
    %v116 = vmax.f32 %v108, 0.0
    %v117 = vmax.f32 %v113, 0.0
    %v118 = vld [vmem:[%s3] sm:$0xff]
    %v119 = vld [vmem:[%s3 + $0x8] sm:$0xff]
    %v120 = vld [vmem:[%s3 + $0x10] sm:$0xff]
    %v121 = vld [vmem:[%s3 + $0x18] sm:$0xff]
    %v122 = vld [vmem:[%s3 + $0x20] sm:$0xff]
    %v123 = vld [vmem:[%s3 + $0x28] sm:$0xff]
    %v124 = vld [vmem:[%s3 + $0x30] sm:$0xff]
    %v125 = vld [vmem:[%s3 + $0x38] sm:$0xff]
    %v126 = vld [vmem:[%s3 + $0x40] sm:$0xff]
    %v127 = vld [vmem:[%s3 + $0x48] sm:$0xff]
    %v128 = vld [vmem:[%s3 + $0x50] sm:$0xff]
    %v129 = vld [vmem:[%s3 + $0x58] sm:$0xff]
    %v130 = vld [vmem:[%s3 + $0x60] sm:$0xff]
    %v131 = vld [vmem:[%s3 + $0x68] sm:$0xff]
    %v132 = vld [vmem:[%s3 + $0x70] sm:$0xff]
    %v133 = vld [vmem:[%s3 + $0x78] sm:$0xff]
    %v134 = vld [vmem:[%s4] sm:$0x1]
    %v136 = vlaneseq
    %v137 = vshrl.u32 %v136, 7
    %v138 = vsub.s32 0, %v137
    %v139 = vrot.slane %v134, %v138
    %141 = vmatprep.subr.mxu0 0.0
    %142 = vmatpush1.msra.mxu0 %v118
    %143 = vmatprep.subr.mxu0 0.0
    %144 = vmatpush1.msra.mxu0 %v119
    %145 = vmatprep.subr.mxu0 0.0
    %146 = vmatpush1.msra.mxu0 %v120
    %147 = vmatprep.subr.mxu0 0.0
    %148 = vmatpush1.msra.mxu0 %v121
    %149 = vmatprep.subr.mxu0 0.0
    %150 = vmatpush1.msra.mxu0 %v122
    %151 = vmatprep.subr.mxu0 0.0
    %152 = vmatpush1.msra.mxu0 %v123
    %153 = vmatprep.subr.mxu0 0.0
    %154 = vmatpush1.msra.mxu0 %v124
    %155 = vmatprep.subr.mxu0 0.0
    %156 = vmatpush1.msra.mxu0 %v125
    %157 = vmatprep.subr.mxu0 0.0
    %158 = vmatpush1.msra.mxu0 %v126
    %159 = vmatprep.subr.mxu0 0.0
    %160 = vmatpush1.msra.mxu0 %v127
    %161 = vmatprep.subr.mxu0 0.0
    %162 = vmatpush1.msra.mxu0 %v128
    %163 = vmatprep.subr.mxu0 0.0
    %164 = vmatpush1.msra.mxu0 %v129
    %165 = vmatprep.subr.mxu0 0.0
    %166 = vmatpush1.msra.mxu0 %v130
    %167 = vmatprep.subr.mxu0 0.0
    %168 = vmatpush1.msra.mxu0 %v131
    %169 = vmatprep.subr.mxu0 0.0
    %170 = vmatpush1.msra.mxu0 %v132
    %171 = vmatprep.subr.mxu0 0.0
    %172 = vmatpush1.msra.mxu0 %v133
    %173 = vmatprep.subr.mxu0 0.0
    %174 = vmatpush1.msra.mxu0 0.0
    %175 = vmatprep.subr.mxu0 0.0
    %176 = vmatpush1.msra.mxu0 0.0
    %177 = vmatprep.subr.mxu0 0.0
    %178 = vmatpush1.msra.mxu0 0.0
    %179 = vmatprep.subr.mxu0 0.0
    %180 = vmatpush1.msra.mxu0 0.0
    %181 = vmatprep.subr.mxu0 0.0
    %182 = vmatpush1.msra.mxu0 0.0
    %183 = vmatprep.subr.mxu0 0.0
    %184 = vmatpush1.msra.mxu0 0.0
    %185 = vmatprep.subr.mxu0 0.0
    %186 = vmatpush1.msra.mxu0 0.0
    %187 = vmatprep.subr.mxu0 0.0
    %188 = vmatpush1.msra.mxu0 0.0
    %189 = vmatprep.subr.mxu0 0.0
    %190 = vmatpush1.msra.mxu0 0.0
    %191 = vmatprep.subr.mxu0 0.0
    %192 = vmatpush1.msra.mxu0 0.0
    %193 = vmatprep.subr.mxu0 0.0
    %194 = vmatpush1.msra.mxu0 0.0
    %195 = vmatprep.subr.mxu0 0.0
    %196 = vmatpush1.msra.mxu0 0.0
    %197 = vmatprep.subr.mxu0 0.0
    %198 = vmatpush1.msra.mxu0 0.0
    %199 = vmatprep.subr.mxu0 0.0
    %200 = vmatpush1.msra.mxu0 0.0
    %201 = vmatprep.subr.mxu0 0.0
    %202 = vmatpush1.msra.mxu0 0.0
    %203 = vmatprep.subr.mxu0 0.0
    %204 = vmatpush1.msra.mxu0 0.0
    %205 = vmatprep.mubr.f32.mxu0 0.0
    %206 = vmatmul.mubr.f32.gmra.mrb[0].mxu0 %v116
    %v207 = vpop.f32.mrb[0].mxu0
    %v208 = vadd.f32 %v139, %v207
    %v209 = vpop.f32.mrb[0].mxu0
    %210 = vmatprep.mubr.f32.mxu0 0.0
    %211 = vmatmul.mubr.f32.gmra.mrb[0].mxu0 %v117
    %v212 = vpop.f32.mrb[0].mxu0
    %v213 = vadd.f32 %v139, %v212
    %v214 = vpop.f32.mrb[0].mxu0
    %215 = vdwg.mxu0
    %216 = vst.msk [vmem:[#allocation2] sm:$0xff] %vm34, %v208
    %217 = vst.msk [vmem:[#allocation2 + $0x8] sm:$0xff] %vm34, %v213
    // Predicated region
    $region22: #{tpu_custom_call.1} parent=1 // pred_check
      _
    $region23: #{tpu_custom_call.1} parent=1 // pred_check_branch
      %219 = sbr.rel (0) target = $region25
    $region24: #{tpu_custom_call.1} parent=1 // pred_region
      %s221 = ssub.s32 256, 256
      %222 = vsyncadd [#allocation3], %s221
      %s223 = sshll.u32 [#allocation2], 4
      %s224 = int_to_ptr.vmem [resolvable:$true] %s223
      %229 = dma.vmem_to_hbm [thread:$0]  %s224, 256, %s5, [#allocation3], 128, 128, 8
    $region25: #{tpu_custom_call.1} parent=1 // pred_fallthru
      _
    // Predicated region
    $region26: #{tpu_custom_call.1} parent=1 // pred_check
      _
    $region27: #{tpu_custom_call.1} parent=1 // pred_check_branch
      %231 = sbr.rel (0) target = $region29
    $region28: #{tpu_custom_call.1} parent=1 // pred_region
      %232 = dma.done [#allocation3], 256
    $region29: #{tpu_custom_call.1} parent=1 // pred_fallthru
      _
    %233 = vsyncpa [#allocation3], 1

</llo_original>
